<compile_context>
chip_gen: v6e
topology: v6e:2x2x1
jax: 0.10.0
libtpu: 0.0.40
codegen_flags: <defaults>
</compile_context>

<pallas_src>
import functools

import jax
import jax.numpy as jnp
from jax.experimental import pallas as pl
from jax.experimental.pallas import tpu as pltpu

EPS = 1e-8          # matches self.eps
THRESHOLD = 1e-4    # matches self.threshold (dead code in the original forward)
NUM_CELL = 3        # stage 1 / stage 2 use three cells


# --------------------------- spatial Pallas kernel ----------------------------

def _spatial_kernel(J, B, P, Ce,
                    probs_sm,                                   # SMEM [J*B*P] f32
                    x_sh_ref, r0_ref, r1_ref, r2_ref,
                    w_sh_ref, w_ref_ref, b_ref,
                    aggr_ref):
    """One (batch, HW-tile) block of cell embeddings + routed aggregation.

    Block shapes (T = spatial tile on the 128-lane axis):
      x_sh_ref : [1, C_l+C_h, T]   shared concat(lidar, hsi) slab
      r*_ref   : [1, C_r, T]       per-cell ref_rgn slab
      w_sh_ref : [J*Ce, C_l+C_h]   lidar|hsi weights of all J cells stacked on M
      w_ref_ref: [J, Ce, C_r]      per-cell ref weights
      b_ref    : [J*Ce, 1]
      aggr_ref : [P, 1, Ce, T]     per-out-path weighted sums (f32)
    """
    b_idx = pl.program_id(0)

    # One GEMM applies the lidar|hsi half of ALL three cells at once.
    sh_emb = jnp.dot(w_sh_ref[...], x_sh_ref[0],
                     preferred_element_type=jnp.float32)        # [J*Ce, T] f32

    ref_refs = (r0_ref, r1_ref, r2_ref)
    for j in range(J):
        # Per-cell: one ref GEMM + bias + ReLU; only one emb live at a time.
        emb = (sh_emb[j * Ce:(j + 1) * Ce, :]
               + jnp.dot(w_ref_ref[j], ref_refs[j][0],
                         preferred_element_type=jnp.float32)
               + b_ref[j * Ce:(j + 1) * Ce, :])
        emb = jnp.maximum(emb, 0.0)                             # [Ce, T] f32

        # Accumulate straight into the output block; coefs are SMEM scalars
        # (scalar x vector multiply — no vreg extracts / broadcasts).
        for p in range(P):
            coef = probs_sm[j * (B * P) + b_idx * P + p]        # scalar f32
            contrib = coef * emb
            if j == 0:
                aggr_ref[p, 0] = contrib
            else:
                aggr_ref[p, 0] += contrib
    # NOTE: gate_mask = (sum_j prob_j < THRESHOLD) is dead code in the original
    # forward and intentionally omitted.


# --------------------------- module wrapper -----------------------------------

def _pick_spatial_tile(hw):
    for t in (2048, 1024, 512, 256, 128):
        if hw % t == 0:
            return t
    return hw   # fall back to the full (un-tiled) extent


@functools.partial(jax.jit, static_argnums=(4, 5))
def dynamic_interaction_layern(hsi, lidar, ref_rgn, params, num_out_path,
                               use_bf16=False):
    B, C_h, H, W = hsi.shape
    _, C_l, _, _ = lidar.shape
    C_r = ref_rgn[0].shape[1]
    J = len(params)
    assert J == NUM_CELL == 3
    Ce = params[0]["w_fuse"].shape[1]
    P = num_out_path
    HW = H * W
    C_sh = C_l + C_h
    T = _pick_spatial_tile(HW)

    # ---- routers: tiny (B x C) work kept OUT of the spatial kernel ----------
    # Shared GAP(lidar); one stacked [C_l, J*P] matmul covers all three cells.
    pooled = jnp.mean(lidar, axis=(2, 3))                               # [B, C_l]
    w_rt = jnp.concatenate([p["w_router"] for p in params], axis=1)     # [C_l, J*P]
    b_rt = jnp.concatenate([p["b_router"] for p in params])             # [J*P]
    probs = jax.nn.sigmoid(pooled @ w_rt + b_rt[None, :]).reshape(B, J, P)
    all_path_prob = jnp.transpose(probs, (0, 2, 1))                     # [B, P, J]
    all_path_prob = all_path_prob / (all_path_prob.sum(-1, keepdims=True) + EPS)
    probs_flat = jnp.transpose(all_path_prob, (2, 0, 1))                # [J, B, P]
    probs_flat = probs_flat.reshape(-1).astype(jnp.float32)             # [J*B*P]

    # ---- activations: NCHW -> [B, C, HW] views (HW lane-dense); one shared
    # concat(lidar, hsi) slab re-used by all three cells ----------------------
    lidar3 = lidar.reshape(B, C_l, HW)
    hsi3 = hsi.reshape(B, C_h, HW)
    x_sh = jnp.concatenate([lidar3, hsi3], axis=1)                      # [B, C_sh, HW]
    refs3 = [r.reshape(B, C_r, HW) for r in ref_rgn]

    # ---- weight packing (tiny): w_fuse rows are ordered [lidar | hsi | ref] -
    w_sh = jnp.concatenate([p["w_fuse"][:C_sh].T for p in params], axis=0)  # [J*Ce, C_sh]
    w_rf = jnp.stack([p["w_fuse"][C_sh:].T for p in params])                # [J, Ce, C_r]
    b_fuse = jnp.concatenate([p["b_fuse"] for p in params])[:, None]        # [J*Ce, 1]
    b_fuse = b_fuse.astype(jnp.float32)

    if use_bf16:
        # MXU-native operand dtype; accumulation / bias / ReLU / routing stay f32.
        x_sh = x_sh.astype(jnp.bfloat16)
        refs3 = [r.astype(jnp.bfloat16) for r in refs3]
        w_sh = w_sh.astype(jnp.bfloat16)
        w_rf = w_rf.astype(jnp.bfloat16)

    grid = (B, HW // T)

    flops = (2 * (J * Ce) * C_sh * B * HW          # shared lidar|hsi GEMM
             + 2 * J * Ce * C_r * B * HW           # per-cell ref GEMMs
             + 2 * J * P * Ce * B * HW)            # weighted aggregation
    bytes_accessed = (
        x_sh.size * x_sh.dtype.itemsize
        + sum(r.size * r.dtype.itemsize for r in refs3)
        + w_sh.size * w_sh.dtype.itemsize
        + w_rf.size * w_rf.dtype.itemsize
        + b_fuse.size * 4 + probs_flat.size * 4
        + P * B * Ce * HW * 4)

    kernel = functools.partial(_spatial_kernel, J, B, P, Ce)

    aggr = pl.pallas_call(
        kernel,
        out_shape=jax.ShapeDtypeStruct((P, B, Ce, HW), jnp.float32),
        grid_spec=pltpu.PrefetchScalarGridSpec(
            num_scalar_prefetch=1,                     # normalised probs -> SMEM
            grid=grid,
            in_specs=[
                pl.BlockSpec((1, C_sh, T), lambda b, t, probs: (b, 0, t)),
                pl.BlockSpec((1, C_r, T), lambda b, t, probs: (b, 0, t)),
                pl.BlockSpec((1, C_r, T), lambda b, t, probs: (b, 0, t)),
                pl.BlockSpec((1, C_r, T), lambda b, t, probs: (b, 0, t)),
                pl.BlockSpec((J * Ce, C_sh), lambda b, t, probs: (0, 0)),
                pl.BlockSpec((J, Ce, C_r), lambda b, t, probs: (0, 0, 0)),
                pl.BlockSpec((J * Ce, 1), lambda b, t, probs: (0, 0)),
            ],
            out_specs=pl.BlockSpec((P, 1, Ce, T),
                                   lambda b, t, probs: (0, b, 0, t)),
        ),
        compiler_params=pltpu.CompilerParams(
            dimension_semantics=("parallel", "parallel"),
            vmem_limit_bytes=64 * 1024 * 1024),
        cost_estimate=pl.CostEstimate(flops=flops, transcendentals=0,
                                      bytes_accessed=bytes_accessed),
    )(probs_flat, x_sh, refs3[0], refs3[1], refs3[2], w_sh, w_rf, b_fuse)

    aggr5 = aggr.reshape(P, B, Ce, H, W)               # back to NCHW (view)
    aggr_res_lst = [aggr5[i] for i in range(P)]
    return aggr_res_lst, all_path_prob


# --------------------------- params & reference -------------------------------

def init_params(key, c_hsi, c_lidar, c_ref, c_emb, num_out_path):
    params = []
    cin = c_lidar + c_hsi + c_ref
    for _ in range(NUM_CELL):
        key, k1, k2, k3, k4 = jax.random.split(key, 5)
        params.append(dict(
            w_fuse=0.1 * jax.random.normal(k1, (cin, c_emb), jnp.float32),
            b_fuse=0.1 * jax.random.normal(k2, (c_emb,), jnp.float32),
            w_router=0.1 * jax.random.normal(k3, (c_lidar, num_out_path), jnp.float32),
            b_router=0.1 * jax.random.normal(k4, (num_out_path,), jnp.float32),
        ))
    return params


def reference(hsi, lidar, ref_rgn, params, num_out_path):
    """Pure-JAX reference of the same forward (for correctness check)."""
    embs, probs = [], []
    pooled = jnp.mean(lidar, axis=(2, 3))                                 # shared GAP
    for j, p in enumerate(params):
        x_cat = jnp.concatenate([lidar, hsi, ref_rgn[j]], axis=1)         # NCHW concat
        emb = jnp.einsum("bcxy,ce->bexy", x_cat, p["w_fuse"]) \
            + p["b_fuse"][None, :, None, None]
        embs.append(jnp.maximum(emb, 0.0))
        probs.append(jax.nn.sigmoid(pooled @ p["w_router"] + p["b_router"][None, :]))
    all_path_prob = jnp.stack(probs, axis=2)                              # [B, P, J]
    all_path_prob = all_path_prob / (all_path_prob.sum(-1, keepdims=True) + EPS)
    path_prob = [all_path_prob[:, :, i] for i in range(len(params))]
    aggr = []
    for i in range(num_out_path):
        res = 0.0
        for j in range(len(params)):
            res = res + path_prob[j][:, i][:, None, None, None] * embs[j]
        aggr.append(res)
    return aggr, all_path_prob


# --------------------------- smoke test ----------------------------------------

if __name__ == "__main__":
    B, C_HSI, C_LIDAR, C_REF, H, W = 2, 4, 4, 4, 16, 16
    C_EMB, NUM_OUT_PATH = 8, 4

    key = jax.random.PRNGKey(0)
    k_h, k_l, k_r, k_p = jax.random.split(key, 4)
    hsi = jax.random.normal(k_h, (B, C_HSI, H, W), jnp.float32)
    lidar = jax.random.normal(k_l, (B, C_LIDAR, H, W), jnp.float32)
    rks = jax.random.split(k_r, NUM_CELL)
    ref_rgn = [jax.random.normal(rks[j], (B, C_REF, H, W), jnp.float32)
               for j in range(NUM_CELL)]
    params = init_params(k_p, C_HSI, C_LIDAR, C_REF, C_EMB, NUM_OUT_PATH)

    # f32 path (tight check)
    aggr_res_lst, all_path_prob = dynamic_interaction_layern(
        hsi, lidar, ref_rgn, params, NUM_OUT_PATH, False)
    jax.block_until_ready(all_path_prob)
    for a in aggr_res_lst:
        jax.block_until_ready(a)

    ref_aggr, ref_prob = reference(hsi, lidar, ref_rgn, params, NUM_OUT_PATH)
    assert all_path_prob.shape == (B, NUM_OUT_PATH, NUM_CELL)
    assert len(aggr_res_lst) == NUM_OUT_PATH
    assert aggr_res_lst[0].shape == (B, C_EMB, H, W)
    assert jnp.allclose(all_path_prob, ref_prob, atol=1e-5, rtol=1e-5)
    for a, r in zip(aggr_res_lst, ref_aggr):
        assert jnp.allclose(a, r, atol=1e-4, rtol=1e-4)

    # bf16 GEMM-operand path (loose check; accumulation stays f32)
    aggr_bf16, prob_bf16 = dynamic_interaction_layern(
        hsi, lidar, ref_rgn, params, NUM_OUT_PATH, True)
    jax.block_until_ready(prob_bf16)
    for a in aggr_bf16:
        jax.block_until_ready(a)
    assert jnp.allclose(prob_bf16, ref_prob, atol=1e-5, rtol=1e-5)
    for a, r in zip(aggr_bf16, ref_aggr):
        assert jnp.allclose(a, r, atol=2e-2, rtol=2e-2)

    print("KERNEL_OK")
</pallas_src>

<mosaic_0001>
module attributes {stable_mosaic.version = 11 : i64} {
  func.func @_spatial_kernel(%arg0: i32, %arg1: i32, %arg2: memref<24xf32, #tpu.memory_space<smem>>, %arg3: memref<1x8x256xf32, #tpu.memory_space<vmem>>, %arg4: memref<1x4x256xf32, #tpu.memory_space<vmem>>, %arg5: memref<1x4x256xf32, #tpu.memory_space<vmem>>, %arg6: memref<1x4x256xf32, #tpu.memory_space<vmem>>, %arg7: memref<24x8xf32, #tpu.memory_space<vmem>>, %arg8: memref<3x8x4xf32, #tpu.memory_space<vmem>>, %arg9: memref<24x1xf32, #tpu.memory_space<vmem>>, %arg10: memref<4x1x8x256xf32, #tpu.memory_space<vmem>>) attributes {dimension_semantics = [#tpu.dimension_semantics<parallel>, #tpu.dimension_semantics<parallel>], iteration_bounds = array<i64: 2, 1>, scalar_prefetch = 1 : i64, scratch_operands = 0 : i64, tpu.core_type = #tpu.core_type<tc>, window_params = [{transform_indices = @transform_0, window_bounds = array<i64: 1, 8, 256>}, {transform_indices = @transform_1, window_bounds = array<i64: 1, 4, 256>}, {transform_indices = @transform_2, window_bounds = array<i64: 1, 4, 256>}, {transform_indices = @transform_3, window_bounds = array<i64: 1, 4, 256>}, {pipeline_mode = #tpu.pipeline_mode<synchronous>, transform_indices = @transform_4, window_bounds = array<i64: 24, 8>}, {pipeline_mode = #tpu.pipeline_mode<synchronous>, transform_indices = @transform_5, window_bounds = array<i64: 3, 8, 4>}, {pipeline_mode = #tpu.pipeline_mode<synchronous>, transform_indices = @transform_6, window_bounds = array<i64: 24, 1>}, {transform_indices = @transform_7, window_bounds = array<i64: 4, 1, 8, 256>}]} {
    %c0 = arith.constant 0 : index
    %c0_0 = arith.constant 0 : index
    %0 = vector.load %arg7[%c0, %c0_0] : memref<24x8xf32, #tpu.memory_space<vmem>>, vector<24x8xf32>
    %c0_1 = arith.constant 0 : index
    %c0_2 = arith.constant 0 : index
    %c0_3 = arith.constant 0 : index
    %1 = vector.load %arg3[%c0_1, %c0_2, %c0_3] : memref<1x8x256xf32, #tpu.memory_space<vmem>>, vector<1x8x256xf32>
    %2 = vector.shape_cast %1 : vector<1x8x256xf32> to vector<8x256xf32>
    %cst = arith.constant dense<0.000000e+00> : vector<24x256xf32>
    %3 = tpu.matmul %0, %2, %cst {dimension_numbers = #tpu.dot_dimension_numbers<[1], [0], [0], [1], [0, 0, 1, 1], [], []>} : vector<24x8xf32>, vector<8x256xf32>, vector<24x256xf32> -> vector<24x256xf32>
    %4 = vector.extract_strided_slice %3 {offsets = [0, 0], sizes = [8, 256], strides = [1, 1]} : vector<24x256xf32> to vector<8x256xf32>
    %c0_4 = arith.constant 0 : index
    %c0_5 = arith.constant 0 : index
    %c0_6 = arith.constant 0 : index
    %5 = vector.load %arg8[%c0_4, %c0_5, %c0_6] : memref<3x8x4xf32, #tpu.memory_space<vmem>>, vector<1x8x4xf32>
    %6 = vector.shape_cast %5 : vector<1x8x4xf32> to vector<8x4xf32>
    %c0_7 = arith.constant 0 : index
    %c0_8 = arith.constant 0 : index
    %c0_9 = arith.constant 0 : index
    %7 = vector.load %arg4[%c0_7, %c0_8, %c0_9] : memref<1x4x256xf32, #tpu.memory_space<vmem>>, vector<1x4x256xf32>
    %8 = vector.shape_cast %7 : vector<1x4x256xf32> to vector<4x256xf32>
    %cst_10 = arith.constant dense<0.000000e+00> : vector<8x256xf32>
    %9 = tpu.matmul %6, %8, %cst_10 {dimension_numbers = #tpu.dot_dimension_numbers<[1], [0], [0], [1], [0, 0, 1, 1], [], []>} : vector<8x4xf32>, vector<4x256xf32>, vector<8x256xf32> -> vector<8x256xf32>
    %10 = arith.addf %4, %9 : vector<8x256xf32>
    %c0_11 = arith.constant 0 : index
    %c0_12 = arith.constant 0 : index
    %11 = vector.load %arg9[%c0_11, %c0_12] : memref<24x1xf32, #tpu.memory_space<vmem>>, vector<8x1xf32>
    %12 = vector.broadcast %11 : vector<8x1xf32> to vector<8x256xf32>
    %13 = arith.addf %10, %12 : vector<8x256xf32>
    %cst_13 = arith.constant 0.000000e+00 : f32
    %14 = vector.broadcast %cst_13 : f32 to vector<8x256xf32>
    %15 = arith.maximumf %13, %14 : vector<8x256xf32>
    %c4_i32 = arith.constant 4 : i32
    %16 = arith.muli %arg0, %c4_i32 : i32
    %c0_i32 = arith.constant 0 : i32
    %17 = arith.addi %c0_i32, %16 : i32
    %c0_i32_14 = arith.constant 0 : i32
    %18 = arith.addi %17, %c0_i32_14 : i32
    %19 = arith.index_cast %18 : i32 to index
    %20 = memref.load %arg2[%19] : memref<24xf32, #tpu.memory_space<smem>>
    %21 = vector.broadcast %20 : f32 to vector<8x256xf32>
    %22 = arith.mulf %21, %15 : vector<8x256xf32>
    %c0_15 = arith.constant 0 : index
    %c0_16 = arith.constant 0 : index
    %c0_17 = arith.constant 0 : index
    %c0_18 = arith.constant 0 : index
    %23 = vector.load %arg10[%c0_15, %c0_16, %c0_17, %c0_18] : memref<4x1x8x256xf32, #tpu.memory_space<vmem>>, vector<1x1x8x256xf32>
    %24 = vector.shape_cast %23 : vector<1x1x8x256xf32> to vector<8x256xf32>
    %25 = vector.shape_cast %22 : vector<8x256xf32> to vector<1x1x8x256xf32>
    tpu.vector_store %arg10[%c0_15, %c0_16, %c0_17, %c0_18], %25 {strides = array<i32>} : memref<4x1x8x256xf32, #tpu.memory_space<vmem>>, vector<1x1x8x256xf32>,
    %c4_i32_19 = arith.constant 4 : i32
    %26 = arith.muli %arg0, %c4_i32_19 : i32
    %c0_i32_20 = arith.constant 0 : i32
    %27 = arith.addi %c0_i32_20, %26 : i32
    %c1_i32 = arith.constant 1 : i32
    %28 = arith.addi %27, %c1_i32 : i32
    %29 = arith.index_cast %28 : i32 to index
    %30 = memref.load %arg2[%29] : memref<24xf32, #tpu.memory_space<smem>>
    %31 = vector.broadcast %30 : f32 to vector<8x256xf32>
    %32 = arith.mulf %31, %15 : vector<8x256xf32>
    %c1 = arith.constant 1 : index
    %c0_21 = arith.constant 0 : index
    %c0_22 = arith.constant 0 : index
    %c0_23 = arith.constant 0 : index
    %33 = vector.load %arg10[%c1, %c0_21, %c0_22, %c0_23] : memref<4x1x8x256xf32, #tpu.memory_space<vmem>>, vector<1x1x8x256xf32>
    %34 = vector.shape_cast %33 : vector<1x1x8x256xf32> to vector<8x256xf32>
    %35 = vector.shape_cast %32 : vector<8x256xf32> to vector<1x1x8x256xf32>
    tpu.vector_store %arg10[%c1, %c0_21, %c0_22, %c0_23], %35 {strides = array<i32>} : memref<4x1x8x256xf32, #tpu.memory_space<vmem>>, vector<1x1x8x256xf32>,
    %c4_i32_24 = arith.constant 4 : i32
    %36 = arith.muli %arg0, %c4_i32_24 : i32
    %c0_i32_25 = arith.constant 0 : i32
    %37 = arith.addi %c0_i32_25, %36 : i32
    %c2_i32 = arith.constant 2 : i32
    %38 = arith.addi %37, %c2_i32 : i32
    %39 = arith.index_cast %38 : i32 to index
    %40 = memref.load %arg2[%39] : memref<24xf32, #tpu.memory_space<smem>>
    %41 = vector.broadcast %40 : f32 to vector<8x256xf32>
    %42 = arith.mulf %41, %15 : vector<8x256xf32>
    %c2 = arith.constant 2 : index
    %c0_26 = arith.constant 0 : index
    %c0_27 = arith.constant 0 : index
    %c0_28 = arith.constant 0 : index
    %43 = vector.load %arg10[%c2, %c0_26, %c0_27, %c0_28] : memref<4x1x8x256xf32, #tpu.memory_space<vmem>>, vector<1x1x8x256xf32>
    %44 = vector.shape_cast %43 : vector<1x1x8x256xf32> to vector<8x256xf32>
    %45 = vector.shape_cast %42 : vector<8x256xf32> to vector<1x1x8x256xf32>
    tpu.vector_store %arg10[%c2, %c0_26, %c0_27, %c0_28], %45 {strides = array<i32>} : memref<4x1x8x256xf32, #tpu.memory_space<vmem>>, vector<1x1x8x256xf32>,
    %c4_i32_29 = arith.constant 4 : i32
    %46 = arith.muli %arg0, %c4_i32_29 : i32
    %c0_i32_30 = arith.constant 0 : i32
    %47 = arith.addi %c0_i32_30, %46 : i32
    %c3_i32 = arith.constant 3 : i32
    %48 = arith.addi %47, %c3_i32 : i32
    %49 = arith.index_cast %48 : i32 to index
    %50 = memref.load %arg2[%49] : memref<24xf32, #tpu.memory_space<smem>>
    %51 = vector.broadcast %50 : f32 to vector<8x256xf32>
    %52 = arith.mulf %51, %15 : vector<8x256xf32>
    %c3 = arith.constant 3 : index
    %c0_31 = arith.constant 0 : index
    %c0_32 = arith.constant 0 : index
    %c0_33 = arith.constant 0 : index
    %53 = vector.load %arg10[%c3, %c0_31, %c0_32, %c0_33] : memref<4x1x8x256xf32, #tpu.memory_space<vmem>>, vector<1x1x8x256xf32>
    %54 = vector.shape_cast %53 : vector<1x1x8x256xf32> to vector<8x256xf32>
    %55 = vector.shape_cast %52 : vector<8x256xf32> to vector<1x1x8x256xf32>
    tpu.vector_store %arg10[%c3, %c0_31, %c0_32, %c0_33], %55 {strides = array<i32>} : memref<4x1x8x256xf32, #tpu.memory_space<vmem>>, vector<1x1x8x256xf32>,
    %56 = vector.extract_strided_slice %3 {offsets = [8, 0], sizes = [8, 256], strides = [1, 1]} : vector<24x256xf32> to vector<8x256xf32>
    %c1_34 = arith.constant 1 : index
    %c0_35 = arith.constant 0 : index
    %c0_36 = arith.constant 0 : index
    %57 = vector.load %arg8[%c1_34, %c0_35, %c0_36] : memref<3x8x4xf32, #tpu.memory_space<vmem>>, vector<1x8x4xf32>
    %58 = vector.shape_cast %57 : vector<1x8x4xf32> to vector<8x4xf32>
    %c0_37 = arith.constant 0 : index
    %c0_38 = arith.constant 0 : index
    %c0_39 = arith.constant 0 : index
    %59 = vector.load %arg5[%c0_37, %c0_38, %c0_39] : memref<1x4x256xf32, #tpu.memory_space<vmem>>, vector<1x4x256xf32>
    %60 = vector.shape_cast %59 : vector<1x4x256xf32> to vector<4x256xf32>
    %cst_40 = arith.constant dense<0.000000e+00> : vector<8x256xf32>
    %61 = tpu.matmul %58, %60, %cst_40 {dimension_numbers = #tpu.dot_dimension_numbers<[1], [0], [0], [1], [0, 0, 1, 1], [], []>} : vector<8x4xf32>, vector<4x256xf32>, vector<8x256xf32> -> vector<8x256xf32>
    %62 = arith.addf %56, %61 : vector<8x256xf32>
    %c8 = arith.constant 8 : index
    %c0_41 = arith.constant 0 : index
    %63 = vector.load %arg9[%c8, %c0_41] : memref<24x1xf32, #tpu.memory_space<vmem>>, vector<8x1xf32>
    %64 = vector.broadcast %63 : vector<8x1xf32> to vector<8x256xf32>
    %65 = arith.addf %62, %64 : vector<8x256xf32>
    %cst_42 = arith.constant 0.000000e+00 : f32
    %66 = vector.broadcast %cst_42 : f32 to vector<8x256xf32>
    %67 = arith.maximumf %65, %66 : vector<8x256xf32>
    %c4_i32_43 = arith.constant 4 : i32
    %68 = arith.muli %arg0, %c4_i32_43 : i32
    %c8_i32 = arith.constant 8 : i32
    %69 = arith.addi %c8_i32, %68 : i32
    %c0_i32_44 = arith.constant 0 : i32
    %70 = arith.addi %69, %c0_i32_44 : i32
    %71 = arith.index_cast %70 : i32 to index
    %72 = memref.load %arg2[%71] : memref<24xf32, #tpu.memory_space<smem>>
    %73 = vector.broadcast %72 : f32 to vector<8x256xf32>
    %74 = arith.mulf %73, %67 : vector<8x256xf32>
    %c0_45 = arith.constant 0 : index
    %c0_46 = arith.constant 0 : index
    %c0_47 = arith.constant 0 : index
    %c0_48 = arith.constant 0 : index
    %75 = vector.load %arg10[%c0_45, %c0_46, %c0_47, %c0_48] : memref<4x1x8x256xf32, #tpu.memory_space<vmem>>, vector<1x1x8x256xf32>
    %76 = vector.shape_cast %75 : vector<1x1x8x256xf32> to vector<8x256xf32>
    %77 = arith.addf %76, %74 : vector<8x256xf32>
    %c0_49 = arith.constant 0 : index
    %c0_50 = arith.constant 0 : index
    %c0_51 = arith.constant 0 : index
    %c0_52 = arith.constant 0 : index
    %78 = vector.load %arg10[%c0_49, %c0_50, %c0_51, %c0_52] : memref<4x1x8x256xf32, #tpu.memory_space<vmem>>, vector<1x1x8x256xf32>
    %79 = vector.shape_cast %78 : vector<1x1x8x256xf32> to vector<8x256xf32>
    %80 = vector.shape_cast %77 : vector<8x256xf32> to vector<1x1x8x256xf32>
    tpu.vector_store %arg10[%c0_49, %c0_50, %c0_51, %c0_52], %80 {strides = array<i32>} : memref<4x1x8x256xf32, #tpu.memory_space<vmem>>, vector<1x1x8x256xf32>,
    %c4_i32_53 = arith.constant 4 : i32
    %81 = arith.muli %arg0, %c4_i32_53 : i32
    %c8_i32_54 = arith.constant 8 : i32
    %82 = arith.addi %c8_i32_54, %81 : i32
    %c1_i32_55 = arith.constant 1 : i32
    %83 = arith.addi %82, %c1_i32_55 : i32
    %84 = arith.index_cast %83 : i32 to index
    %85 = memref.load %arg2[%84] : memref<24xf32, #tpu.memory_space<smem>>
    %86 = vector.broadcast %85 : f32 to vector<8x256xf32>
    %87 = arith.mulf %86, %67 : vector<8x256xf32>
    %c1_56 = arith.constant 1 : index
    %c0_57 = arith.constant 0 : index
    %c0_58 = arith.constant 0 : index
    %c0_59 = arith.constant 0 : index
    %88 = vector.load %arg10[%c1_56, %c0_57, %c0_58, %c0_59] : memref<4x1x8x256xf32, #tpu.memory_space<vmem>>, vector<1x1x8x256xf32>
    %89 = vector.shape_cast %88 : vector<1x1x8x256xf32> to vector<8x256xf32>
    %90 = arith.addf %89, %87 : vector<8x256xf32>
    %c1_60 = arith.constant 1 : index
    %c0_61 = arith.constant 0 : index
    %c0_62 = arith.constant 0 : index
    %c0_63 = arith.constant 0 : index
    %91 = vector.load %arg10[%c1_60, %c0_61, %c0_62, %c0_63] : memref<4x1x8x256xf32, #tpu.memory_space<vmem>>, vector<1x1x8x256xf32>
    %92 = vector.shape_cast %91 : vector<1x1x8x256xf32> to vector<8x256xf32>
    %93 = vector.shape_cast %90 : vector<8x256xf32> to vector<1x1x8x256xf32>
    tpu.vector_store %arg10[%c1_60, %c0_61, %c0_62, %c0_63], %93 {strides = array<i32>} : memref<4x1x8x256xf32, #tpu.memory_space<vmem>>, vector<1x1x8x256xf32>,
    %c4_i32_64 = arith.constant 4 : i32
    %94 = arith.muli %arg0, %c4_i32_64 : i32
    %c8_i32_65 = arith.constant 8 : i32
    %95 = arith.addi %c8_i32_65, %94 : i32
    %c2_i32_66 = arith.constant 2 : i32
    %96 = arith.addi %95, %c2_i32_66 : i32
    %97 = arith.index_cast %96 : i32 to index
    %98 = memref.load %arg2[%97] : memref<24xf32, #tpu.memory_space<smem>>
    %99 = vector.broadcast %98 : f32 to vector<8x256xf32>
    %100 = arith.mulf %99, %67 : vector<8x256xf32>
    %c2_67 = arith.constant 2 : index
    %c0_68 = arith.constant 0 : index
    %c0_69 = arith.constant 0 : index
    %c0_70 = arith.constant 0 : index
    %101 = vector.load %arg10[%c2_67, %c0_68, %c0_69, %c0_70] : memref<4x1x8x256xf32, #tpu.memory_space<vmem>>, vector<1x1x8x256xf32>
    %102 = vector.shape_cast %101 : vector<1x1x8x256xf32> to vector<8x256xf32>
    %103 = arith.addf %102, %100 : vector<8x256xf32>
    %c2_71 = arith.constant 2 : index
    %c0_72 = arith.constant 0 : index
    %c0_73 = arith.constant 0 : index
    %c0_74 = arith.constant 0 : index
    %104 = vector.load %arg10[%c2_71, %c0_72, %c0_73, %c0_74] : memref<4x1x8x256xf32, #tpu.memory_space<vmem>>, vector<1x1x8x256xf32>
    %105 = vector.shape_cast %104 : vector<1x1x8x256xf32> to vector<8x256xf32>
    %106 = vector.shape_cast %103 : vector<8x256xf32> to vector<1x1x8x256xf32>
    tpu.vector_store %arg10[%c2_71, %c0_72, %c0_73, %c0_74], %106 {strides = array<i32>} : memref<4x1x8x256xf32, #tpu.memory_space<vmem>>, vector<1x1x8x256xf32>,
    %c4_i32_75 = arith.constant 4 : i32
    %107 = arith.muli %arg0, %c4_i32_75 : i32
    %c8_i32_76 = arith.constant 8 : i32
    %108 = arith.addi %c8_i32_76, %107 : i32
    %c3_i32_77 = arith.constant 3 : i32
    %109 = arith.addi %108, %c3_i32_77 : i32
    %110 = arith.index_cast %109 : i32 to index
    %111 = memref.load %arg2[%110] : memref<24xf32, #tpu.memory_space<smem>>
    %112 = vector.broadcast %111 : f32 to vector<8x256xf32>
    %113 = arith.mulf %112, %67 : vector<8x256xf32>
    %c3_78 = arith.constant 3 : index
    %c0_79 = arith.constant 0 : index
    %c0_80 = arith.constant 0 : index
    %c0_81 = arith.constant 0 : index
    %114 = vector.load %arg10[%c3_78, %c0_79, %c0_80, %c0_81] : memref<4x1x8x256xf32, #tpu.memory_space<vmem>>, vector<1x1x8x256xf32>
    %115 = vector.shape_cast %114 : vector<1x1x8x256xf32> to vector<8x256xf32>
    %116 = arith.addf %115, %113 : vector<8x256xf32>
    %c3_82 = arith.constant 3 : index
    %c0_83 = arith.constant 0 : index
    %c0_84 = arith.constant 0 : index
    %c0_85 = arith.constant 0 : index
    %117 = vector.load %arg10[%c3_82, %c0_83, %c0_84, %c0_85] : memref<4x1x8x256xf32, #tpu.memory_space<vmem>>, vector<1x1x8x256xf32>
    %118 = vector.shape_cast %117 : vector<1x1x8x256xf32> to vector<8x256xf32>
    %119 = vector.shape_cast %116 : vector<8x256xf32> to vector<1x1x8x256xf32>
    tpu.vector_store %arg10[%c3_82, %c0_83, %c0_84, %c0_85], %119 {strides = array<i32>} : memref<4x1x8x256xf32, #tpu.memory_space<vmem>>, vector<1x1x8x256xf32>,
    %120 = vector.extract_strided_slice %3 {offsets = [16, 0], sizes = [8, 256], strides = [1, 1]} : vector<24x256xf32> to vector<8x256xf32>
    %c2_86 = arith.constant 2 : index
    %c0_87 = arith.constant 0 : index
    %c0_88 = arith.constant 0 : index
    %121 = vector.load %arg8[%c2_86, %c0_87, %c0_88] : memref<3x8x4xf32, #tpu.memory_space<vmem>>, vector<1x8x4xf32>
    %122 = vector.shape_cast %121 : vector<1x8x4xf32> to vector<8x4xf32>
    %c0_89 = arith.constant 0 : index
    %c0_90 = arith.constant 0 : index
    %c0_91 = arith.constant 0 : index
    %123 = vector.load %arg6[%c0_89, %c0_90, %c0_91] : memref<1x4x256xf32, #tpu.memory_space<vmem>>, vector<1x4x256xf32>
    %124 = vector.shape_cast %123 : vector<1x4x256xf32> to vector<4x256xf32>
    %cst_92 = arith.constant dense<0.000000e+00> : vector<8x256xf32>
    %125 = tpu.matmul %122, %124, %cst_92 {dimension_numbers = #tpu.dot_dimension_numbers<[1], [0], [0], [1], [0, 0, 1, 1], [], []>} : vector<8x4xf32>, vector<4x256xf32>, vector<8x256xf32> -> vector<8x256xf32>
    %126 = arith.addf %120, %125 : vector<8x256xf32>
    %c16 = arith.constant 16 : index
    %c0_93 = arith.constant 0 : index
    %127 = vector.load %arg9[%c16, %c0_93] : memref<24x1xf32, #tpu.memory_space<vmem>>, vector<8x1xf32>
    %128 = vector.broadcast %127 : vector<8x1xf32> to vector<8x256xf32>
    %129 = arith.addf %126, %128 : vector<8x256xf32>
    %cst_94 = arith.constant 0.000000e+00 : f32
    %130 = vector.broadcast %cst_94 : f32 to vector<8x256xf32>
    %131 = arith.maximumf %129, %130 : vector<8x256xf32>
    %c4_i32_95 = arith.constant 4 : i32
    %132 = arith.muli %arg0, %c4_i32_95 : i32
    %c16_i32 = arith.constant 16 : i32
    %133 = arith.addi %c16_i32, %132 : i32
    %c0_i32_96 = arith.constant 0 : i32
    %134 = arith.addi %133, %c0_i32_96 : i32
    %135 = arith.index_cast %134 : i32 to index
    %136 = memref.load %arg2[%135] : memref<24xf32, #tpu.memory_space<smem>>
    %137 = vector.broadcast %136 : f32 to vector<8x256xf32>
    %138 = arith.mulf %137, %131 : vector<8x256xf32>
    %c0_97 = arith.constant 0 : index
    %c0_98 = arith.constant 0 : index
    %c0_99 = arith.constant 0 : index
    %c0_100 = arith.constant 0 : index
    %139 = vector.load %arg10[%c0_97, %c0_98, %c0_99, %c0_100] : memref<4x1x8x256xf32, #tpu.memory_space<vmem>>, vector<1x1x8x256xf32>
    %140 = vector.shape_cast %139 : vector<1x1x8x256xf32> to vector<8x256xf32>
    %141 = arith.addf %140, %138 : vector<8x256xf32>
    %c0_101 = arith.constant 0 : index
    %c0_102 = arith.constant 0 : index
    %c0_103 = arith.constant 0 : index
    %c0_104 = arith.constant 0 : index
    %142 = vector.load %arg10[%c0_101, %c0_102, %c0_103, %c0_104] : memref<4x1x8x256xf32, #tpu.memory_space<vmem>>, vector<1x1x8x256xf32>
    %143 = vector.shape_cast %142 : vector<1x1x8x256xf32> to vector<8x256xf32>
    %144 = vector.shape_cast %141 : vector<8x256xf32> to vector<1x1x8x256xf32>
    tpu.vector_store %arg10[%c0_101, %c0_102, %c0_103, %c0_104], %144 {strides = array<i32>} : memref<4x1x8x256xf32, #tpu.memory_space<vmem>>, vector<1x1x8x256xf32>,
    %c4_i32_105 = arith.constant 4 : i32
    %145 = arith.muli %arg0, %c4_i32_105 : i32
    %c16_i32_106 = arith.constant 16 : i32
    %146 = arith.addi %c16_i32_106, %145 : i32
    %c1_i32_107 = arith.constant 1 : i32
    %147 = arith.addi %146, %c1_i32_107 : i32
    %148 = arith.index_cast %147 : i32 to index
    %149 = memref.load %arg2[%148] : memref<24xf32, #tpu.memory_space<smem>>
    %150 = vector.broadcast %149 : f32 to vector<8x256xf32>
    %151 = arith.mulf %150, %131 : vector<8x256xf32>
    %c1_108 = arith.constant 1 : index
    %c0_109 = arith.constant 0 : index
    %c0_110 = arith.constant 0 : index
    %c0_111 = arith.constant 0 : index
    %152 = vector.load %arg10[%c1_108, %c0_109, %c0_110, %c0_111] : memref<4x1x8x256xf32, #tpu.memory_space<vmem>>, vector<1x1x8x256xf32>
    %153 = vector.shape_cast %152 : vector<1x1x8x256xf32> to vector<8x256xf32>
    %154 = arith.addf %153, %151 : vector<8x256xf32>
    %c1_112 = arith.constant 1 : index
    %c0_113 = arith.constant 0 : index
    %c0_114 = arith.constant 0 : index
    %c0_115 = arith.constant 0 : index
    %155 = vector.load %arg10[%c1_112, %c0_113, %c0_114, %c0_115] : memref<4x1x8x256xf32, #tpu.memory_space<vmem>>, vector<1x1x8x256xf32>
    %156 = vector.shape_cast %155 : vector<1x1x8x256xf32> to vector<8x256xf32>
    %157 = vector.shape_cast %154 : vector<8x256xf32> to vector<1x1x8x256xf32>
    tpu.vector_store %arg10[%c1_112, %c0_113, %c0_114, %c0_115], %157 {strides = array<i32>} : memref<4x1x8x256xf32, #tpu.memory_space<vmem>>, vector<1x1x8x256xf32>,
    %c4_i32_116 = arith.constant 4 : i32
    %158 = arith.muli %arg0, %c4_i32_116 : i32
    %c16_i32_117 = arith.constant 16 : i32
    %159 = arith.addi %c16_i32_117, %158 : i32
    %c2_i32_118 = arith.constant 2 : i32
    %160 = arith.addi %159, %c2_i32_118 : i32
    %161 = arith.index_cast %160 : i32 to index
    %162 = memref.load %arg2[%161] : memref<24xf32, #tpu.memory_space<smem>>
    %163 = vector.broadcast %162 : f32 to vector<8x256xf32>
    %164 = arith.mulf %163, %131 : vector<8x256xf32>
    %c2_119 = arith.constant 2 : index
    %c0_120 = arith.constant 0 : index
    %c0_121 = arith.constant 0 : index
    %c0_122 = arith.constant 0 : index
    %165 = vector.load %arg10[%c2_119, %c0_120, %c0_121, %c0_122] : memref<4x1x8x256xf32, #tpu.memory_space<vmem>>, vector<1x1x8x256xf32>
    %166 = vector.shape_cast %165 : vector<1x1x8x256xf32> to vector<8x256xf32>
    %167 = arith.addf %166, %164 : vector<8x256xf32>
    %c2_123 = arith.constant 2 : index
    %c0_124 = arith.constant 0 : index
    %c0_125 = arith.constant 0 : index
    %c0_126 = arith.constant 0 : index
    %168 = vector.load %arg10[%c2_123, %c0_124, %c0_125, %c0_126] : memref<4x1x8x256xf32, #tpu.memory_space<vmem>>, vector<1x1x8x256xf32>
    %169 = vector.shape_cast %168 : vector<1x1x8x256xf32> to vector<8x256xf32>
    %170 = vector.shape_cast %167 : vector<8x256xf32> to vector<1x1x8x256xf32>
    tpu.vector_store %arg10[%c2_123, %c0_124, %c0_125, %c0_126], %170 {strides = array<i32>} : memref<4x1x8x256xf32, #tpu.memory_space<vmem>>, vector<1x1x8x256xf32>,
    %c4_i32_127 = arith.constant 4 : i32
    %171 = arith.muli %arg0, %c4_i32_127 : i32
    %c16_i32_128 = arith.constant 16 : i32
    %172 = arith.addi %c16_i32_128, %171 : i32
    %c3_i32_129 = arith.constant 3 : i32
    %173 = arith.addi %172, %c3_i32_129 : i32
    %174 = arith.index_cast %173 : i32 to index
    %175 = memref.load %arg2[%174] : memref<24xf32, #tpu.memory_space<smem>>
    %176 = vector.broadcast %175 : f32 to vector<8x256xf32>
    %177 = arith.mulf %176, %131 : vector<8x256xf32>
    %c3_130 = arith.constant 3 : index
    %c0_131 = arith.constant 0 : index
    %c0_132 = arith.constant 0 : index
    %c0_133 = arith.constant 0 : index
    %178 = vector.load %arg10[%c3_130, %c0_131, %c0_132, %c0_133] : memref<4x1x8x256xf32, #tpu.memory_space<vmem>>, vector<1x1x8x256xf32>
    %179 = vector.shape_cast %178 : vector<1x1x8x256xf32> to vector<8x256xf32>
    %180 = arith.addf %179, %177 : vector<8x256xf32>
    %c3_134 = arith.constant 3 : index
    %c0_135 = arith.constant 0 : index
    %c0_136 = arith.constant 0 : index
    %c0_137 = arith.constant 0 : index
    %181 = vector.load %arg10[%c3_134, %c0_135, %c0_136, %c0_137] : memref<4x1x8x256xf32, #tpu.memory_space<vmem>>, vector<1x1x8x256xf32>
    %182 = vector.shape_cast %181 : vector<1x1x8x256xf32> to vector<8x256xf32>
    %183 = vector.shape_cast %180 : vector<8x256xf32> to vector<1x1x8x256xf32>
    tpu.vector_store %arg10[%c3_134, %c0_135, %c0_136, %c0_137], %183 {strides = array<i32>} : memref<4x1x8x256xf32, #tpu.memory_space<vmem>>, vector<1x1x8x256xf32>,
    return
  }
  func.func @transform_0(%arg0: i32, %arg1: i32, %arg2: memref<24xf32, #tpu.memory_space<smem>>) -> (i32, i32, i32) {
    %c0_i32 = arith.constant 0 : i32
    %c0_i32_0 = arith.constant 0 : i32
    return %arg0, %c0_i32, %arg1 : i32, i32, i32
  }
  func.func @transform_1(%arg0: i32, %arg1: i32, %arg2: memref<24xf32, #tpu.memory_space<smem>>) -> (i32, i32, i32) {
    %c0_i32 = arith.constant 0 : i32
    %c0_i32_0 = arith.constant 0 : i32
    return %arg0, %c0_i32, %arg1 : i32, i32, i32
  }
  func.func @transform_2(%arg0: i32, %arg1: i32, %arg2: memref<24xf32, #tpu.memory_space<smem>>) -> (i32, i32, i32) {
    %c0_i32 = arith.constant 0 : i32
    %c0_i32_0 = arith.constant 0 : i32
    return %arg0, %c0_i32, %arg1 : i32, i32, i32
  }
  func.func @transform_3(%arg0: i32, %arg1: i32, %arg2: memref<24xf32, #tpu.memory_space<smem>>) -> (i32, i32, i32) {
    %c0_i32 = arith.constant 0 : i32
    %c0_i32_0 = arith.constant 0 : i32
    return %arg0, %c0_i32, %arg1 : i32, i32, i32
  }
  func.func @transform_4(%arg0: i32, %arg1: i32, %arg2: memref<24xf32, #tpu.memory_space<smem>>) -> (i32, i32) {
    %c0_i32 = arith.constant 0 : i32
    %c0_i32_0 = arith.constant 0 : i32
    %c0_i32_1 = arith.constant 0 : i32
    return %c0_i32, %c0_i32_0 : i32, i32
  }
  func.func @transform_5(%arg0: i32, %arg1: i32, %arg2: memref<24xf32, #tpu.memory_space<smem>>) -> (i32, i32, i32) {
    %c0_i32 = arith.constant 0 : i32
    %c0_i32_0 = arith.constant 0 : i32
    %c0_i32_1 = arith.constant 0 : i32
    %c0_i32_2 = arith.constant 0 : i32
    return %c0_i32, %c0_i32_0, %c0_i32_1 : i32, i32, i32
  }
  func.func @transform_6(%arg0: i32, %arg1: i32, %arg2: memref<24xf32, #tpu.memory_space<smem>>) -> (i32, i32) {
    %c0_i32 = arith.constant 0 : i32
    %c0_i32_0 = arith.constant 0 : i32
    %c0_i32_1 = arith.constant 0 : i32
    return %c0_i32, %c0_i32_0 : i32, i32
  }
  func.func @transform_7(%arg0: i32, %arg1: i32, %arg2: memref<24xf32, #tpu.memory_space<smem>>) -> (i32, i32, i32, i32) {
    %c0_i32 = arith.constant 0 : i32
    %c0_i32_0 = arith.constant 0 : i32
    %c0_i32_1 = arith.constant 0 : i32
    return %c0_i32, %arg0, %c0_i32_0, %arg1 : i32, i32, i32, i32
  }
}

</mosaic_0001>

<llo_original>
// kernel: squeeze.4
$region0: #{squeeze.4}
  %s0 = inlined_call_operand.vmem [shape: f32[1,2,8,256], index: 0, kind: input, shape index: {}]
  %s1 = inlined_call_operand.hbm [shape: f32[2,8,16,16], index: 1, kind: output, shape index: {}]
  $region1: #{squeeze.4} parent=0
    #allocation0 [shape = 'u8[131072]{0}', space=vmem, size = 0x20000, scoped, tag = 'operand span for operand 1']
    #allocation1 [shape = 's32[1]{0}', space=sflag, size = 0x4, scoped, tag = 'scoped memory for squeeze.4']
    %2 = vsyncpa [#allocation1], 0
    %v3 = vld [vmem:[%s0] sm:$0xff]
    %vm4 = vcmask 130048
    %5 = vst.msk [vmem:[#allocation0] ss:$16 sm:$0x3] %vm4, %v3
    %6 = vst.msk [vmem:[#allocation0] ss:$16 sm:$0xc] %vm4, %v3
    %7 = vst.msk [vmem:[#allocation0] ss:$16 sm:$0x30] %vm4, %v3
    %8 = vst.msk [vmem:[#allocation0] ss:$16 sm:$0xc0] %vm4, %v3
    %s9 = scalar_lea.vmem %s0, 8
    %v10 = vld [vmem:[%s9] sm:$0xff]
    %vm11 = vcmask 130048
    %s12 = scalar_lea.vmem [#allocation0], 8
    %13 = vst.msk [vmem:[%s12] ss:$16 sm:$0x3] %vm11, %v10
    %s14 = scalar_lea.vmem [#allocation0], 8
    %15 = vst.msk [vmem:[%s14] ss:$16 sm:$0xc] %vm11, %v10
    %s16 = scalar_lea.vmem [#allocation0], 8
    %17 = vst.msk [vmem:[%s16] ss:$16 sm:$0x30] %vm11, %v10
    %s18 = scalar_lea.vmem [#allocation0], 8
    %19 = vst.msk [vmem:[%s18] ss:$16 sm:$0xc0] %vm11, %v10
    %s20 = scalar_lea.vmem %s0, 16
    %v21 = vld [vmem:[%s20] sm:$0xff]
    %vm22 = vcmask 130048
    %s23 = scalar_lea.vmem [#allocation0], 128
    %24 = vst.msk [vmem:[%s23] ss:$16 sm:$0x3] %vm22, %v21
    %s25 = scalar_lea.vmem [#allocation0], 128
    %26 = vst.msk [vmem:[%s25] ss:$16 sm:$0xc] %vm22, %v21
    %s27 = scalar_lea.vmem [#allocation0], 128
    %28 = vst.msk [vmem:[%s27] ss:$16 sm:$0x30] %vm22, %v21
    %s29 = scalar_lea.vmem [#allocation0], 128
    %30 = vst.msk [vmem:[%s29] ss:$16 sm:$0xc0] %vm22, %v21
    %s31 = scalar_lea.vmem %s0, 24
    %v32 = vld [vmem:[%s31] sm:$0xff]
    %vm33 = vcmask 130048
    %s34 = scalar_lea.vmem [#allocation0], 136
    %35 = vst.msk [vmem:[%s34] ss:$16 sm:$0x3] %vm33, %v32
    %s36 = scalar_lea.vmem [#allocation0], 136
    %37 = vst.msk [vmem:[%s36] ss:$16 sm:$0xc] %vm33, %v32
    %s38 = scalar_lea.vmem [#allocation0], 136
    %39 = vst.msk [vmem:[%s38] ss:$16 sm:$0x30] %vm33, %v32
    %s40 = scalar_lea.vmem [#allocation0], 136
    %41 = vst.msk [vmem:[%s40] ss:$16 sm:$0xc0] %vm33, %v32
    %v42 = vld.sshfl [vmem:[%s0] sm:$0xff pattern:$0xb3a29180]
    %43 = vrot.lane.b32.xlu0 %v42, 112
    %v44 = vpop.permute.xlu0 %43
    %vm45 = vcmask 130048
    %s46 = scalar_lea.vmem [#allocation0], 1
    %47 = vst.msk [vmem:[%s46] ss:$8 sm:$0xf] %vm45, %v44
    %s48 = scalar_lea.vmem [#allocation0], 1
    %49 = vst.msk [vmem:[%s48] ss:$8 sm:$0xf0] %vm45, %v44
    %s50 = scalar_lea.vmem %s0, 4
    %v51 = vld.sshfl [vmem:[%s50] sm:$0xff pattern:$0xb3a29180]
    %52 = vrot.lane.b32.xlu0 %v51, 112
    %v53 = vpop.permute.xlu0 %52
    %vm54 = vcmask 130048
    %s55 = scalar_lea.vmem [#allocation0], 65
    %56 = vst.msk [vmem:[%s55] ss:$8 sm:$0xf] %vm54, %v53
    %s57 = scalar_lea.vmem [#allocation0], 65
    %58 = vst.msk [vmem:[%s57] ss:$8 sm:$0xf0] %vm54, %v53
    %s59 = scalar_lea.vmem %s0, 16
    %v60 = vld.sshfl [vmem:[%s59] sm:$0xff pattern:$0xb3a29180]
    %61 = vrot.lane.b32.xlu0 %v60, 112
    %v62 = vpop.permute.xlu0 %61
    %vm63 = vcmask 130048
    %s64 = scalar_lea.vmem [#allocation0], 129
    %65 = vst.msk [vmem:[%s64] ss:$8 sm:$0xf] %vm63, %v62
    %s66 = scalar_lea.vmem [#allocation0], 129
    %67 = vst.msk [vmem:[%s66] ss:$8 sm:$0xf0] %vm63, %v62
    %s68 = scalar_lea.vmem %s0, 20
    %v69 = vld.sshfl [vmem:[%s68] sm:$0xff pattern:$0xb3a29180]
    %70 = vrot.lane.b32.xlu0 %v69, 112
    %v71 = vpop.permute.xlu0 %70
    %vm72 = vcmask 130048
    %s73 = scalar_lea.vmem [#allocation0], 193
    %74 = vst.msk [vmem:[%s73] ss:$8 sm:$0xf] %vm72, %v71
    %s75 = scalar_lea.vmem [#allocation0], 193
    %76 = vst.msk [vmem:[%s75] ss:$8 sm:$0xf0] %vm72, %v71
    %v77 = vld.sshfl [vmem:[%s0] sm:$0xff pattern:$0xb3a29180]
    %78 = vrot.lane.b32.xlu0 %v77, 96
    %v79 = vpop.permute.xlu0 %78
    %vm80 = vcmask 130048
    %s81 = scalar_lea.vmem [#allocation0], 2
    %82 = vst.msk [vmem:[%s81] ss:$8 sm:$0xf] %vm80, %v79
    %s83 = scalar_lea.vmem [#allocation0], 2
    %84 = vst.msk [vmem:[%s83] ss:$8 sm:$0xf0] %vm80, %v79
    %s85 = scalar_lea.vmem %s0, 4
    %v86 = vld.sshfl [vmem:[%s85] sm:$0xff pattern:$0xb3a29180]
    %87 = vrot.lane.b32.xlu0 %v86, 96
    %v88 = vpop.permute.xlu0 %87
    %vm89 = vcmask 130048
    %s90 = scalar_lea.vmem [#allocation0], 66
    %91 = vst.msk [vmem:[%s90] ss:$8 sm:$0xf] %vm89, %v88
    %s92 = scalar_lea.vmem [#allocation0], 66
    %93 = vst.msk [vmem:[%s92] ss:$8 sm:$0xf0] %vm89, %v88
    %s94 = scalar_lea.vmem %s0, 16
    %v95 = vld.sshfl [vmem:[%s94] sm:$0xff pattern:$0xb3a29180]
    %96 = vrot.lane.b32.xlu0 %v95, 96
    %v97 = vpop.permute.xlu0 %96
    %vm98 = vcmask 130048
    %s99 = scalar_lea.vmem [#allocation0], 130
    %100 = vst.msk [vmem:[%s99] ss:$8 sm:$0xf] %vm98, %v97
    %s101 = scalar_lea.vmem [#allocation0], 130
    %102 = vst.msk [vmem:[%s101] ss:$8 sm:$0xf0] %vm98, %v97
    %s103 = scalar_lea.vmem %s0, 20
    %v104 = vld.sshfl [vmem:[%s103] sm:$0xff pattern:$0xb3a29180]
    %105 = vrot.lane.b32.xlu0 %v104, 96
    %v106 = vpop.permute.xlu0 %105
    %vm107 = vcmask 130048
    %s108 = scalar_lea.vmem [#allocation0], 194
    %109 = vst.msk [vmem:[%s108] ss:$8 sm:$0xf] %vm107, %v106
    %s110 = scalar_lea.vmem [#allocation0], 194
    %111 = vst.msk [vmem:[%s110] ss:$8 sm:$0xf0] %vm107, %v106
    %v112 = vld.sshfl [vmem:[%s0] sm:$0xff pattern:$0xb3a29180]
    %113 = vrot.lane.b32.xlu0 %v112, 80
    %v114 = vpop.permute.xlu0 %113
    %vm115 = vcmask 130048
    %s116 = scalar_lea.vmem [#allocation0], 3
    %117 = vst.msk [vmem:[%s116] ss:$8 sm:$0xf] %vm115, %v114
    %s118 = scalar_lea.vmem [#allocation0], 3
    %119 = vst.msk [vmem:[%s118] ss:$8 sm:$0xf0] %vm115, %v114
    %s120 = scalar_lea.vmem %s0, 4
    %v121 = vld.sshfl [vmem:[%s120] sm:$0xff pattern:$0xb3a29180]
    %122 = vrot.lane.b32.xlu0 %v121, 80
    %v123 = vpop.permute.xlu0 %122
    %vm124 = vcmask 130048
    %s125 = scalar_lea.vmem [#allocation0], 67
    %126 = vst.msk [vmem:[%s125] ss:$8 sm:$0xf] %vm124, %v123
    %s127 = scalar_lea.vmem [#allocation0], 67
    %128 = vst.msk [vmem:[%s127] ss:$8 sm:$0xf0] %vm124, %v123
    %s129 = scalar_lea.vmem %s0, 16
    %v130 = vld.sshfl [vmem:[%s129] sm:$0xff pattern:$0xb3a29180]
    %131 = vrot.lane.b32.xlu0 %v130, 80
    %v132 = vpop.permute.xlu0 %131
    %vm133 = vcmask 130048
    %s134 = scalar_lea.vmem [#allocation0], 131
    %135 = vst.msk [vmem:[%s134] ss:$8 sm:$0xf] %vm133, %v132
    %s136 = scalar_lea.vmem [#allocation0], 131
    %137 = vst.msk [vmem:[%s136] ss:$8 sm:$0xf0] %vm133, %v132
    %s138 = scalar_lea.vmem %s0, 20
    %v139 = vld.sshfl [vmem:[%s138] sm:$0xff pattern:$0xb3a29180]
    %140 = vrot.lane.b32.xlu0 %v139, 80
    %v141 = vpop.permute.xlu0 %140
    %vm142 = vcmask 130048
    %s143 = scalar_lea.vmem [#allocation0], 195
    %144 = vst.msk [vmem:[%s143] ss:$8 sm:$0xf] %vm142, %v141
    %s145 = scalar_lea.vmem [#allocation0], 195
    %146 = vst.msk [vmem:[%s145] ss:$8 sm:$0xf0] %vm142, %v141
    %v147 = vld.sshfl [vmem:[%s0] sm:$0xff pattern:$0xb3a29180]
    %148 = vrot.lane.b32.xlu0 %v147, 64
    %v149 = vpop.permute.xlu0 %148
    %vm150 = vcmask 130048
    %s151 = scalar_lea.vmem [#allocation0], 4
    %152 = vst.msk [vmem:[%s151] ss:$8 sm:$0xf] %vm150, %v149
    %s153 = scalar_lea.vmem [#allocation0], 4
    %154 = vst.msk [vmem:[%s153] ss:$8 sm:$0xf0] %vm150, %v149
    %s155 = scalar_lea.vmem %s0, 4
    %v156 = vld.sshfl [vmem:[%s155] sm:$0xff pattern:$0xb3a29180]
    %157 = vrot.lane.b32.xlu0 %v156, 64
    %v158 = vpop.permute.xlu0 %157
    %vm159 = vcmask 130048
    %s160 = scalar_lea.vmem [#allocation0], 68
    %161 = vst.msk [vmem:[%s160] ss:$8 sm:$0xf] %vm159, %v158
    %s162 = scalar_lea.vmem [#allocation0], 68
    %163 = vst.msk [vmem:[%s162] ss:$8 sm:$0xf0] %vm159, %v158
    %s164 = scalar_lea.vmem %s0, 16
    %v165 = vld.sshfl [vmem:[%s164] sm:$0xff pattern:$0xb3a29180]
    %166 = vrot.lane.b32.xlu0 %v165, 64
    %v167 = vpop.permute.xlu0 %166
    %vm168 = vcmask 130048
    %s169 = scalar_lea.vmem [#allocation0], 132
    %170 = vst.msk [vmem:[%s169] ss:$8 sm:$0xf] %vm168, %v167
    %s171 = scalar_lea.vmem [#allocation0], 132
    %172 = vst.msk [vmem:[%s171] ss:$8 sm:$0xf0] %vm168, %v167
    %s173 = scalar_lea.vmem %s0, 20
    %v174 = vld.sshfl [vmem:[%s173] sm:$0xff pattern:$0xb3a29180]
    %175 = vrot.lane.b32.xlu0 %v174, 64
    %v176 = vpop.permute.xlu0 %175
    %vm177 = vcmask 130048
    %s178 = scalar_lea.vmem [#allocation0], 196
    %179 = vst.msk [vmem:[%s178] ss:$8 sm:$0xf] %vm177, %v176
    %s180 = scalar_lea.vmem [#allocation0], 196
    %181 = vst.msk [vmem:[%s180] ss:$8 sm:$0xf0] %vm177, %v176
    %v182 = vld.sshfl [vmem:[%s0] sm:$0xff pattern:$0xb3a29180]
    %183 = vrot.lane.b32.xlu0 %v182, 48
    %v184 = vpop.permute.xlu0 %183
    %vm185 = vcmask 130048
    %s186 = scalar_lea.vmem [#allocation0], 5
    %187 = vst.msk [vmem:[%s186] ss:$8 sm:$0xf] %vm185, %v184
    %s188 = scalar_lea.vmem [#allocation0], 5
    %189 = vst.msk [vmem:[%s188] ss:$8 sm:$0xf0] %vm185, %v184
    %s190 = scalar_lea.vmem %s0, 4
    %v191 = vld.sshfl [vmem:[%s190] sm:$0xff pattern:$0xb3a29180]
    %192 = vrot.lane.b32.xlu0 %v191, 48
    %v193 = vpop.permute.xlu0 %192
    %vm194 = vcmask 130048
    %s195 = scalar_lea.vmem [#allocation0], 69
    %196 = vst.msk [vmem:[%s195] ss:$8 sm:$0xf] %vm194, %v193
    %s197 = scalar_lea.vmem [#allocation0], 69
    %198 = vst.msk [vmem:[%s197] ss:$8 sm:$0xf0] %vm194, %v193
    %s199 = scalar_lea.vmem %s0, 16
    %v200 = vld.sshfl [vmem:[%s199] sm:$0xff pattern:$0xb3a29180]
    %201 = vrot.lane.b32.xlu0 %v200, 48
    %v202 = vpop.permute.xlu0 %201
    %vm203 = vcmask 130048
    %s204 = scalar_lea.vmem [#allocation0], 133
    %205 = vst.msk [vmem:[%s204] ss:$8 sm:$0xf] %vm203, %v202
    %s206 = scalar_lea.vmem [#allocation0], 133
    %207 = vst.msk [vmem:[%s206] ss:$8 sm:$0xf0] %vm203, %v202
    %s208 = scalar_lea.vmem %s0, 20
    %v209 = vld.sshfl [vmem:[%s208] sm:$0xff pattern:$0xb3a29180]
    %210 = vrot.lane.b32.xlu0 %v209, 48
    %v211 = vpop.permute.xlu0 %210
    %vm212 = vcmask 130048
    %s213 = scalar_lea.vmem [#allocation0], 197
    %214 = vst.msk [vmem:[%s213] ss:$8 sm:$0xf] %vm212, %v211
    %s215 = scalar_lea.vmem [#allocation0], 197
    %216 = vst.msk [vmem:[%s215] ss:$8 sm:$0xf0] %vm212, %v211
    %v217 = vld.sshfl [vmem:[%s0] sm:$0xff pattern:$0xb3a29180]
    %218 = vrot.lane.b32.xlu0 %v217, 32
    %v219 = vpop.permute.xlu0 %218
    %vm220 = vcmask 130048
    %s221 = scalar_lea.vmem [#allocation0], 6
    %222 = vst.msk [vmem:[%s221] ss:$8 sm:$0xf] %vm220, %v219
    %s223 = scalar_lea.vmem [#allocation0], 6
    %224 = vst.msk [vmem:[%s223] ss:$8 sm:$0xf0] %vm220, %v219
    %s225 = scalar_lea.vmem %s0, 4
    %v226 = vld.sshfl [vmem:[%s225] sm:$0xff pattern:$0xb3a29180]
    %227 = vrot.lane.b32.xlu0 %v226, 32
    %v228 = vpop.permute.xlu0 %227
    %vm229 = vcmask 130048
    %s230 = scalar_lea.vmem [#allocation0], 70
    %231 = vst.msk [vmem:[%s230] ss:$8 sm:$0xf] %vm229, %v228
    %s232 = scalar_lea.vmem [#allocation0], 70
    %233 = vst.msk [vmem:[%s232] ss:$8 sm:$0xf0] %vm229, %v228
    %s234 = scalar_lea.vmem %s0, 16
    %v235 = vld.sshfl [vmem:[%s234] sm:$0xff pattern:$0xb3a29180]
    %236 = vrot.lane.b32.xlu0 %v235, 32
    %v237 = vpop.permute.xlu0 %236
    %vm238 = vcmask 130048
    %s239 = scalar_lea.vmem [#allocation0], 134
    %240 = vst.msk [vmem:[%s239] ss:$8 sm:$0xf] %vm238, %v237
    %s241 = scalar_lea.vmem [#allocation0], 134
    %242 = vst.msk [vmem:[%s241] ss:$8 sm:$0xf0] %vm238, %v237
    %s243 = scalar_lea.vmem %s0, 20
    %v244 = vld.sshfl [vmem:[%s243] sm:$0xff pattern:$0xb3a29180]
    %245 = vrot.lane.b32.xlu0 %v244, 32
    %v246 = vpop.permute.xlu0 %245
    %vm247 = vcmask 130048
    %s248 = scalar_lea.vmem [#allocation0], 198
    %249 = vst.msk [vmem:[%s248] ss:$8 sm:$0xf] %vm247, %v246
    %s250 = scalar_lea.vmem [#allocation0], 198
    %251 = vst.msk [vmem:[%s250] ss:$8 sm:$0xf0] %vm247, %v246
    %v252 = vld.sshfl [vmem:[%s0] sm:$0xff pattern:$0xb3a29180]
    %253 = vrot.lane.b32.xlu0 %v252, 16
    %v254 = vpop.permute.xlu0 %253
    %vm255 = vcmask 130048
    %s256 = scalar_lea.vmem [#allocation0], 7
    %257 = vst.msk [vmem:[%s256] ss:$8 sm:$0xf] %vm255, %v254
    %s258 = scalar_lea.vmem [#allocation0], 7
    %259 = vst.msk [vmem:[%s258] ss:$8 sm:$0xf0] %vm255, %v254
    %s260 = scalar_lea.vmem %s0, 4
    %v261 = vld.sshfl [vmem:[%s260] sm:$0xff pattern:$0xb3a29180]
    %262 = vrot.lane.b32.xlu0 %v261, 16
    %v263 = vpop.permute.xlu0 %262
    %vm264 = vcmask 130048
    %s265 = scalar_lea.vmem [#allocation0], 71
    %266 = vst.msk [vmem:[%s265] ss:$8 sm:$0xf] %vm264, %v263
    %s267 = scalar_lea.vmem [#allocation0], 71
    %268 = vst.msk [vmem:[%s267] ss:$8 sm:$0xf0] %vm264, %v263
    %s269 = scalar_lea.vmem %s0, 16
    %v270 = vld.sshfl [vmem:[%s269] sm:$0xff pattern:$0xb3a29180]
    %271 = vrot.lane.b32.xlu0 %v270, 16
    %v272 = vpop.permute.xlu0 %271
    %vm273 = vcmask 130048
    %s274 = scalar_lea.vmem [#allocation0], 135
    %275 = vst.msk [vmem:[%s274] ss:$8 sm:$0xf] %vm273, %v272
    %s276 = scalar_lea.vmem [#allocation0], 135
    %277 = vst.msk [vmem:[%s276] ss:$8 sm:$0xf0] %vm273, %v272
    %s278 = scalar_lea.vmem %s0, 20
    %v279 = vld.sshfl [vmem:[%s278] sm:$0xff pattern:$0xb3a29180]
    %280 = vrot.lane.b32.xlu0 %v279, 16
    %v281 = vpop.permute.xlu0 %280
    %vm282 = vcmask 130048
    %s283 = scalar_lea.vmem [#allocation0], 199
    %284 = vst.msk [vmem:[%s283] ss:$8 sm:$0xf] %vm282, %v281
    %s285 = scalar_lea.vmem [#allocation0], 199
    %286 = vst.msk [vmem:[%s285] ss:$8 sm:$0xf0] %vm282, %v281
    %s288 = ssub.s32 4096, 4096
    %289 = vsyncadd [#allocation1], %s288
    %s291 = sshll.u32 [#allocation0], 4
    %s292 = int_to_ptr.vmem [resolvable:$true] %s291
    %294 = dma.vmem_to_hbm [thread:$0]  %s292, 4096, %s1, [#allocation1]
    %295 = dma.done [#allocation1], 4096
    %296 = vsyncpa [#allocation1], 1

</llo_original>
